<compile_context>
chip_gen: v7x
topology: tpu7x:2x2x1
jax: 0.10.0
libtpu: 0.0.40
codegen_flags: <defaults>
</compile_context>

<pallas_src>
import jax
import jax.numpy as jnp
from jax.experimental import pallas as pl
from jax.experimental.pallas import tpu as pltpu


def _round_up(x, m):
    return ((x + m - 1) // m) * m


def _linear_kernel(x_ref, w_ref, b_ref, o_ref):
    # MXU matmul with f32 accumulation + VPU bias add.  The add stays in f32
    # (cheap on every generation, incl. v5e which has no bf16 VALU); the cast
    # happens only at the store.
    acc = jnp.dot(x_ref[...], w_ref[...], preferred_element_type=jnp.float32)
    o_ref[...] = (acc + b_ref[...]).astype(o_ref.dtype)


def prepare_linear_params(weight, bias):
    """One-time parameter prep (do this at init, not per forward call).

    weight: (N, K) PyTorch nn.Linear layout; bias: (N,).
    Returns:
      w_t : (K, N) transposed weight (no lane padding: blocks equal to the full
            array dims are legal, and the output is now written unpadded).
      b2d : (1, N) bias, reshaped for row-broadcast inside the kernel.
    """
    return weight.T, bias.reshape(1, -1)


def data_embedding(x, w_t, b2d, *, tm=2048):
    """x: (B, L, K) ; w_t: (K, N) ; b2d: (1, N) -> (B, L, N)."""
    B, L, K = x.shape
    N = w_t.shape[1]
    M = B * L

    # Row-tile size.  Large tiles amortize the ~0.35 us per-grid-step overhead
    # (1024-2048 sits at the HBM roofline); capping at ceil(M/2) (8-aligned)
    # guarantees grid_m >= 2 so the "parallel" M axis feeds both TensorCores on
    # v7x.  K and N are small, so double-buffered tiles stay far below every
    # generation's VMEM budget even at TM=2048.
    TM = min(tm, _round_up(-(-M // 2), 8))
    grid_m = pl.cdiv(M, TM)

    x2d = x.reshape(M, K)

    cost = pl.CostEstimate(
        flops=2 * M * K * N,
        bytes_accessed=x2d.dtype.itemsize * (M * K + K * N + N + M * N),
        transcendentals=0,
    )

    out2d = pl.pallas_call(
        _linear_kernel,
        out_shape=jax.ShapeDtypeStruct((M, N), x.dtype),
        grid_spec=pltpu.PrefetchScalarGridSpec(
            num_scalar_prefetch=0,
            grid=(grid_m,),
            in_specs=[
                pl.BlockSpec((TM, K), lambda i: (i, 0)),   # streamed activations
                pl.BlockSpec((K, N), lambda i: (0, 0)),    # resident weight
                pl.BlockSpec((1, N), lambda i: (0, 0)),    # resident bias
            ],
            out_specs=pl.BlockSpec((TM, N), lambda i: (i, 0)),
        ),
        compiler_params=pltpu.CompilerParams(
            dimension_semantics=("parallel",),   # shards row tiles across TCs on v7x
            vmem_limit_bytes=48 * 1024 * 1024,   # > v5e's 16 MiB default, < v7x's 64 MiB
        ),
        cost_estimate=cost,
    )(x2d, w_t, b2d)

    return out2d.reshape(B, L, N)


if __name__ == "__main__":
    # Small shapes consistent with the module's forward: Linear over the last dim.
    batch, seq, input_size, embedding_size = 2, 8, 4, 32

    key = jax.random.PRNGKey(0)
    kx, kw, kb = jax.random.split(key, 3)

    x = jax.random.normal(kx, (batch, seq, input_size), dtype=jnp.float32)

    # nn.Linear-shaped parameters: weight (embedding_size, input_size), bias (embedding_size,)
    bound = 1.0 / (input_size ** 0.5)
    weight = jax.random.uniform(
        kw, (embedding_size, input_size), dtype=jnp.float32,
        minval=-bound, maxval=bound)
    bias = jax.random.uniform(
        kb, (embedding_size,), dtype=jnp.float32, minval=-bound, maxval=bound)

    # One-time parameter prep (transpose + reshape), then the kernel call.
    w_t, b2d = prepare_linear_params(weight, bias)
    out = data_embedding(x, w_t, b2d)
    out = jax.block_until_ready(out)

    # Pure-JAX reference check of the forward semantics.
    ref = x @ weight.T + bias
    assert out.shape == (batch, seq, embedding_size)
    assert jnp.allclose(out, ref, atol=1e-5, rtol=1e-5)

    print("KERNEL_OK")
</pallas_src>

<mosaic_0001>
module attributes {stable_mosaic.version = 11 : i64} {
  func.func @_linear_kernel(%arg0: i32, %arg1: memref<8x4xf32, #tpu.memory_space<vmem>>, %arg2: memref<4x32xf32, #tpu.memory_space<vmem>>, %arg3: memref<1x32xf32, #tpu.memory_space<vmem>>, %arg4: memref<8x32xf32, #tpu.memory_space<vmem>>) attributes {dimension_semantics = [#tpu.dimension_semantics<parallel>], iteration_bounds = array<i64: 2>, scalar_prefetch = 0 : i64, scratch_operands = 0 : i64, tpu.core_type = #tpu.core_type<tc>, window_params = [{transform_indices = @transform_0, window_bounds = array<i64: 8, 4>}, {pipeline_mode = #tpu.pipeline_mode<synchronous>, transform_indices = @transform_1, window_bounds = array<i64: 4, 32>}, {pipeline_mode = #tpu.pipeline_mode<synchronous>, transform_indices = @transform_2, window_bounds = array<i64: 1, 32>}, {transform_indices = @transform_3, window_bounds = array<i64: 8, 32>}]} {
    %c0 = arith.constant 0 : index
    %c0_0 = arith.constant 0 : index
    %0 = vector.load %arg1[%c0, %c0_0] : memref<8x4xf32, #tpu.memory_space<vmem>>, vector<8x4xf32>
    %c0_1 = arith.constant 0 : index
    %c0_2 = arith.constant 0 : index
    %1 = vector.load %arg2[%c0_1, %c0_2] : memref<4x32xf32, #tpu.memory_space<vmem>>, vector<4x32xf32>
    %cst = arith.constant dense<0.000000e+00> : vector<8x32xf32>
    %2 = tpu.matmul %0, %1, %cst {dimension_numbers = #tpu.dot_dimension_numbers<[1], [0], [0], [1], [0, 0, 1, 1], [], []>} : vector<8x4xf32>, vector<4x32xf32>, vector<8x32xf32> -> vector<8x32xf32>
    %c0_3 = arith.constant 0 : index
    %c0_4 = arith.constant 0 : index
    %3 = vector.load %arg3[%c0_3, %c0_4] : memref<1x32xf32, #tpu.memory_space<vmem>>, vector<1x32xf32>
    %4 = vector.broadcast %3 : vector<1x32xf32> to vector<8x32xf32>
    %5 = arith.addf %2, %4 : vector<8x32xf32>
    %c0_5 = arith.constant 0 : index
    %c0_6 = arith.constant 0 : index
    %6 = vector.load %arg4[%c0_5, %c0_6] : memref<8x32xf32, #tpu.memory_space<vmem>>, vector<8x32xf32>
    tpu.vector_store %arg4[%c0_5, %c0_6], %5 {strides = array<i32>} : memref<8x32xf32, #tpu.memory_space<vmem>>, vector<8x32xf32>,
    return
  }
  func.func @transform_0(%arg0: i32) -> (i32, i32) {
    %c0_i32 = arith.constant 0 : i32
    %c0_i32_0 = arith.constant 0 : i32
    return %arg0, %c0_i32 : i32, i32
  }
  func.func @transform_1(%arg0: i32) -> (i32, i32) {
    %c0_i32 = arith.constant 0 : i32
    %c0_i32_0 = arith.constant 0 : i32
    %c0_i32_1 = arith.constant 0 : i32
    return %c0_i32, %c0_i32_0 : i32, i32
  }
  func.func @transform_2(%arg0: i32) -> (i32, i32) {
    %c0_i32 = arith.constant 0 : i32
    %c0_i32_0 = arith.constant 0 : i32
    %c0_i32_1 = arith.constant 0 : i32
    return %c0_i32, %c0_i32_0 : i32, i32
  }
  func.func @transform_3(%arg0: i32) -> (i32, i32) {
    %c0_i32 = arith.constant 0 : i32
    %c0_i32_0 = arith.constant 0 : i32
    return %arg0, %c0_i32 : i32, i32
  }
}

</mosaic_0001>

<llo_original>
// kernel: tpu_custom_call.1
$region0: #{tpu_custom_call.1}
  #allocation0 [shape = 'u32[]', space=smem, size = 0x4, offset = 0x4, fixed_abs, tag = 'smem constant byte address 0x4 - core index']
  #allocation1 [shape = 'u32[144,128]{1,0:T(1,128)}', space=vmem, size = 0x12000, scoped, tag = 'internal scratch']
  %s0 = inlined_call_operand.vmem [shape: f32[16,4], index: 0, kind: input, shape index: {}]
  %s1 = inlined_call_operand.vmem [shape: f32[4,32], index: 1, kind: input, shape index: {}]
  %s2 = inlined_call_operand.vmem [shape: f32[1,32], index: 2, kind: input, shape index: {}]
  %s3 = inlined_call_operand.hbm [shape: f32[16,32], index: 3, kind: output, shape index: {}]
  %s4 = sld [smem:[#allocation0]]
  $region45: #{tpu_custom_call.1} parent=0
    _
  %s6 = ssub.s32 1, %s4
  %s7 = scalar_select 0, %s6, %s4
  $region1: #{tpu_custom_call.1} parent=0
    #allocation2 [shape = 'u8[8192]{0}', space=vmem, size = 0x2000, scoped, tag = 'output window, operand 0']
    #allocation3 [shape = 's32[2]{0}', space=sflag, size = 0x8, scoped, tag = 'scoped memory for tpu_custom_call.1']
    %8 = vsyncpa [#allocation3], 0
    %s9 = scalar_lea.sflag [#allocation3], 1
    %10 = vsyncpa %s9, 0
    loop: start=0, step=1, limit=4
    $region2: #{tpu_custom_call.1} parent=1 // loop_pre_header
      _
    $region3: #{tpu_custom_call.1} parent=1 // loop_header
      %s12 = sphi 0, %s16
      %p13 = scmp.ge.s32.totalorder %s12, 4
      %s22 = sphi 0, %s24
      %s25 = sphi 0, %s22
      %s26 = sphi 0, %s25
      %s42 = sphi 0, %s26
      %s46 = sphi 0, %s46
      %s48 = sphi 0, %s46
      %s49 = sphi 0, %s48
      %s63 = sphi 0, %s49
      %s67 = sphi 0, %s67
      %s69 = sphi 0, %s67
      %s70 = sphi 0, %s69
      %s84 = sphi 0, %s70
      %s90 = sphi 0, %s92
      %s93 = sphi 0, %s90
      %s94 = sphi 0, %s93
      %s110 = sphi 0, %s94
    $region4: #{tpu_custom_call.1} parent=1 // loop_header_branch
      %15 = sbr.rel (%p13) target = $region8
    $region5: #{tpu_custom_call.1} parent=1 // loop_body
      %s17 = ssub.s32 %s12, 1
      %s18 = ssub.s32 %s12, 2
      %s19 = sadd.s32 %s12, 1
      %s20 = ssub.s32 %s12, %s19
      %p21 = scmp.eq.s32.totalorder %s20, 0
      %s23 = sadd.s32 %s22, 1
      %s24 = scalar_select %p21, %s22, %s23
      %p27 = pneg %p21
      %p28 = scmp.eq.s32.totalorder %s12, 1
      %p29 = por %p27, %p28
      %p30 = scmp.ne.s32.totalorder %s22, %s25
      %p31 = scmp.eq.s32.totalorder %s12, 0
      %p32 = por %p30, %p31
      %p33 = scmp.ne.s32.totalorder %s22, %s25
      %p34 = scmp.eq.s32.totalorder %s17, 1
      %p35 = por %p33, %p34
      %p36 = scmp.ne.s32.totalorder %s25, %s26
      %p37 = scmp.eq.s32.totalorder %s17, 0
      %p38 = por %p36, %p37
      %p39 = scmp.ne.s32.totalorder %s25, %s26
      %p40 = scmp.eq.s32.totalorder %s18, 1
      %p41 = por %p39, %p40
      %p43 = scmp.ne.s32.totalorder %s26, %s42
      %p44 = scmp.eq.s32.totalorder %s18, 0
      %p45 = por %p43, %p44
      %s47 = sadd.s32 %s46, 1
      %p50 = scmp.eq.s32.totalorder %s12, 1
      %p51 = scmp.ne.s32.totalorder %s46, %s48
      %p52 = scmp.eq.s32.totalorder %s12, 0
      %p53 = por %p51, %p52
      %p54 = scmp.ne.s32.totalorder %s46, %s48
      %p55 = scmp.eq.s32.totalorder %s17, 1
      %p56 = por %p54, %p55
      %p57 = scmp.ne.s32.totalorder %s48, %s49
      %p58 = scmp.eq.s32.totalorder %s17, 0
      %p59 = por %p57, %p58
      %p60 = scmp.ne.s32.totalorder %s48, %s49
      %p61 = scmp.eq.s32.totalorder %s18, 1
      %p62 = por %p60, %p61
      %p64 = scmp.ne.s32.totalorder %s49, %s63
      %p65 = scmp.eq.s32.totalorder %s18, 0
      %p66 = por %p64, %p65
      %s68 = sadd.s32 %s67, 1
      %p71 = scmp.eq.s32.totalorder %s12, 1
      %p72 = scmp.ne.s32.totalorder %s67, %s69
      %p73 = scmp.eq.s32.totalorder %s12, 0
      %p74 = por %p72, %p73
      %p75 = scmp.ne.s32.totalorder %s67, %s69
      %p76 = scmp.eq.s32.totalorder %s17, 1
      %p77 = por %p75, %p76
      %p78 = scmp.ne.s32.totalorder %s69, %s70
      %p79 = scmp.eq.s32.totalorder %s17, 0
      %p80 = por %p78, %p79
      %p81 = scmp.ne.s32.totalorder %s69, %s70
      %p82 = scmp.eq.s32.totalorder %s18, 1
      %p83 = por %p81, %p82
      %p85 = scmp.ne.s32.totalorder %s70, %s84
      %p86 = scmp.eq.s32.totalorder %s18, 0
      %p87 = por %p85, %p86
      %s88 = ssub.s32 %s12, %s19
      %p89 = scmp.eq.s32.totalorder %s88, 0
      %s91 = sadd.s32 %s90, 1
      %s92 = scalar_select %p89, %s90, %s91
      %p95 = pneg %p89
      %p96 = scmp.eq.s32.totalorder %s12, 1
      %p97 = por %p95, %p96
      %p98 = scmp.ne.s32.totalorder %s90, %s93
      %p99 = scmp.eq.s32.totalorder %s12, 0
      %p100 = por %p98, %p99
      %p101 = scmp.ne.s32.totalorder %s90, %s93
      %p102 = scmp.eq.s32.totalorder %s17, 1
      %p103 = por %p101, %p102
      %p104 = scmp.ne.s32.totalorder %s93, %s94
      %p105 = scmp.eq.s32.totalorder %s17, 0
      %p106 = por %p104, %p105
      %p107 = scmp.ne.s32.totalorder %s93, %s94
      %p108 = scmp.eq.s32.totalorder %s18, 1
      %p109 = por %p107, %p108
      %p111 = scmp.ne.s32.totalorder %s94, %s110
      %p112 = scmp.eq.s32.totalorder %s18, 0
      %p113 = por %p111, %p112
      %p114 = scmp.le.s32.totalorder 1, %s12
      %p115 = scmp.lt.s32.totalorder %s12, 3
      %p116 = pnand %p114, %p115
      %p117 = pneg %p116
      // Predicated region
      $region9: #{tpu_custom_call.1} parent=5 // pred_check
        _
      $region10: #{tpu_custom_call.1} parent=5 // pred_check_branch
        %119 = sbr.rel (%p116) target = $region12
      $region11: #{tpu_custom_call.1} parent=5 // pred_region
        %s120 = ssub.s32 %s12, 1
        // Predicated region
        $region13: #{tpu_custom_call.1} parent=11 // pred_check
          %p121 = pneg %p59
        $region14: #{tpu_custom_call.1} parent=11 // pred_check_branch
          %123 = sbr.rel (%p121) target = $region16
        $region15: #{tpu_custom_call.1} parent=11 // pred_region
          _
        $region16: #{tpu_custom_call.1} parent=11 // pred_fallthru
          _
        // Predicated region
        $region17: #{tpu_custom_call.1} parent=11 // pred_check
          %p124 = pneg %p80
        $region18: #{tpu_custom_call.1} parent=11 // pred_check_branch
          %126 = sbr.rel (%p124) target = $region20
        $region19: #{tpu_custom_call.1} parent=11 // pred_region
          _
        $region20: #{tpu_custom_call.1} parent=11 // pred_fallthru
          _
      $region12: #{tpu_custom_call.1} parent=5 // pred_fallthru
        _
      %p127 = scmp.lt.s32.totalorder %s12, 2
      // Predicated region
      $region21: #{tpu_custom_call.1} parent=5 // pred_check
        %p128 = pneg %p127
      $region22: #{tpu_custom_call.1} parent=5 // pred_check_branch
        %130 = sbr.rel (%p128) target = $region24
      $region23: #{tpu_custom_call.1} parent=5 // pred_region
        // Predicated region
        $region25: #{tpu_custom_call.1} parent=23 // pred_check
          %p131 = pneg %p32
        $region26: #{tpu_custom_call.1} parent=23 // pred_check_branch
          %133 = sbr.rel (%p131) target = $region28
        $region27: #{tpu_custom_call.1} parent=23 // pred_region
          %p134 = scmp.lt.s32.totalorder %s12, 1
          %s135 = scalar_select %p134, %s12, 1
          %s136 = smul.addr %s135, 8
          %s137 = scalar_lea.vmem %s0, %s136
        $region28: #{tpu_custom_call.1} parent=23 // pred_fallthru
          _
      $region24: #{tpu_custom_call.1} parent=5 // pred_fallthru
        _
      %p138 = scmp.le.s32.totalorder 1, %s12
      %p139 = scmp.lt.s32.totalorder %s12, 3
      %p140 = pnand %p138, %p139
      %p141 = pneg %p140
      // Predicated region
      $region29: #{tpu_custom_call.1} parent=5 // pred_check
        _
      $region30: #{tpu_custom_call.1} parent=5 // pred_check_branch
        %143 = sbr.rel (%p140) target = $region32
      $region31: #{tpu_custom_call.1} parent=5 // pred_region
        %s144 = ssub.s32 %s12, 1
        %p145 = scmp.lt.s32.totalorder %s17, 1
        %s146 = scalar_select %p145, %s17, 1
        %s147 = smul.addr %s146, 8
        %s148 = scalar_lea.vmem %s0, %s147
        %p149 = pneg %p38
        %p150 = pneg %p35
        %p151 = pneg %p59
        %p152 = pneg %p56
        %p153 = pneg %p80
        %p154 = pneg %p77
        %p155 = pneg %p106
        %p156 = pneg %p103
        %s157 = sand.u32 %s93, 1
        %s158 = scalar_lea.sflag [#allocation3], %s157
        %s159 = sand.u32 %s93, 1
        %s160 = smul.addr %s159, 8
        %s161 = scalar_lea.vmem [#allocation2], %s160
        %p162 = scmp.lt.s32.totalorder %s17, 1
        %s163 = scalar_select %p162, %s17, 1
        %s164 = smul.addr %s163, 8
        %s165 = scalar_lea.vmem %s0, %s164
        %v166 = vld [vmem:[%s165] sm:$0xff]
        %v167 = vld [vmem:[%s1] sm:$0xf]
        %v168 = vld [vmem:[%s2] sm:$0x1]
        %v170 = vlaneseq
        %v171 = vshrl.u32 %v170, 7
        %v172 = vsub.s32 0, %v171
        %v173 = vrot.slane %v168, %v172
        %vm175 = vcmask 31744
        %v177 = vsel %vm175, %v166, 0
        %vm179 = vcmask 1043456
        %v181 = vsel %vm179, %v167, 0
        %183 = vmatprep.subr.mxu0 0.0
        %184 = vmatpush1.msra.mxu0 %v181
        %185 = vmatprep.subr.mxu0 0.0
        %186 = vmatpush1.msra.mxu0 0.0
        %187 = vmatprep.subr.mxu0 0.0
        %188 = vmatpush1.msra.mxu0 0.0
        %189 = vmatprep.subr.mxu0 0.0
        %190 = vmatpush1.msra.mxu0 0.0
        %191 = vmatprep.subr.mxu0 0.0
        %192 = vmatpush1.msra.mxu0 0.0
        %193 = vmatprep.subr.mxu0 0.0
        %194 = vmatpush1.msra.mxu0 0.0
        %195 = vmatprep.subr.mxu0 0.0
        %196 = vmatpush1.msra.mxu0 0.0
        %197 = vmatprep.subr.mxu0 0.0
        %198 = vmatpush1.msra.mxu0 0.0
        %199 = vmatprep.subr.mxu0 0.0
        %200 = vmatpush1.msra.mxu0 0.0
        %201 = vmatprep.subr.mxu0 0.0
        %202 = vmatpush1.msra.mxu0 0.0
        %203 = vmatprep.subr.mxu0 0.0
        %204 = vmatpush1.msra.mxu0 0.0
        %205 = vmatprep.subr.mxu0 0.0
        %206 = vmatpush1.msra.mxu0 0.0
        %207 = vmatprep.subr.mxu0 0.0
        %208 = vmatpush1.msra.mxu0 0.0
        %209 = vmatprep.subr.mxu0 0.0
        %210 = vmatpush1.msra.mxu0 0.0
        %211 = vmatprep.subr.mxu0 0.0
        %212 = vmatpush1.msra.mxu0 0.0
        %213 = vmatprep.subr.mxu0 0.0
        %214 = vmatpush1.msra.mxu0 0.0
        %215 = vmatprep.subr.mxu0 0.0
        %216 = vmatpush1.msra.mxu0 0.0
        %217 = vmatprep.subr.mxu0 0.0
        %218 = vmatpush1.msra.mxu0 0.0
        %219 = vmatprep.subr.mxu0 0.0
        %220 = vmatpush1.msra.mxu0 0.0
        %221 = vmatprep.subr.mxu0 0.0
        %222 = vmatpush1.msra.mxu0 0.0
        %223 = vmatprep.subr.mxu0 0.0
        %224 = vmatpush1.msra.mxu0 0.0
        %225 = vmatprep.subr.mxu0 0.0
        %226 = vmatpush1.msra.mxu0 0.0
        %227 = vmatprep.subr.mxu0 0.0
        %228 = vmatpush1.msra.mxu0 0.0
        %229 = vmatprep.subr.mxu0 0.0
        %230 = vmatpush1.msra.mxu0 0.0
        %231 = vmatprep.subr.mxu0 0.0
        %232 = vmatpush1.msra.mxu0 0.0
        %233 = vmatprep.subr.mxu0 0.0
        %234 = vmatpush1.msra.mxu0 0.0
        %235 = vmatprep.subr.mxu0 0.0
        %236 = vmatpush1.msra.mxu0 0.0
        %237 = vmatprep.subr.mxu0 0.0
        %238 = vmatpush1.msra.mxu0 0.0
        %239 = vmatprep.subr.mxu0 0.0
        %240 = vmatpush1.msra.mxu0 0.0
        %241 = vmatprep.subr.mxu0 0.0
        %242 = vmatpush1.msra.mxu0 0.0
        %243 = vmatprep.subr.mxu0 0.0
        %244 = vmatpush1.msra.mxu0 0.0
        %245 = vmatprep.subr.mxu0 0.0
        %246 = vmatpush1.msra.mxu0 0.0
        %247 = vmatprep.mubr.f32.mxu0 0.0
        %248 = vmatmul.mubr.f32.gmra.mrb[0].mxu0 %v177
        %v249 = vpop.f32.mrb[0].mxu0
        %v250 = vadd.f32 %v173, %v249
        %v251 = vpop.f32.mrb[0].mxu0
        %252 = vdwg.mxu0
        %vm253 = vcmask 261120
        %254 = vst.msk [vmem:[%s161] sm:$0xff] %vm253, %v250
        %s255 = sand.u32 %s93, 1
        %s256 = scalar_lea.sflag [#allocation3], %s255
        %s257 = sand.u32 %s93, 1
        %s258 = smul.addr %s257, 8
        %s259 = scalar_lea.vmem [#allocation2], %s258
        // Predicated region
        $region33: #{tpu_custom_call.1} parent=31 // pred_check
          %p260 = pneg %p103
        $region34: #{tpu_custom_call.1} parent=31 // pred_check_branch
          %262 = sbr.rel (%p260) target = $region36
        $region35: #{tpu_custom_call.1} parent=31 // pred_region
          %s264 = ssub.s32 128, 128
          %265 = vsyncadd %s256, %s264
          %s266 = smul.addr %s17, 128
          %s267 = scalar_lea.hbm %s3, %s266
          %s269 = sshll.u32 %s259, 4
          %s270 = int_to_ptr.vmem [resolvable:$true] %s269
          %272 = dma.vmem_to_hbm [thread:$0]  %s270, 128, %s267, %s256
        $region36: #{tpu_custom_call.1} parent=31 // pred_fallthru
          _
      $region32: #{tpu_custom_call.1} parent=5 // pred_fallthru
        _
      %p273 = scmp.le.s32.totalorder 2, %s12
      // Predicated region
      $region37: #{tpu_custom_call.1} parent=5 // pred_check
        %p274 = pneg %p273
      $region38: #{tpu_custom_call.1} parent=5 // pred_check_branch
        %276 = sbr.rel (%p274) target = $region40
      $region39: #{tpu_custom_call.1} parent=5 // pred_region
        %s277 = ssub.s32 %s12, 2
        // Predicated region
        $region41: #{tpu_custom_call.1} parent=39 // pred_check
          %p278 = pneg %p109
        $region42: #{tpu_custom_call.1} parent=39 // pred_check_branch
          %280 = sbr.rel (%p278) target = $region44
        $region43: #{tpu_custom_call.1} parent=39 // pred_region
          %s281 = sand.u32 %s94, 1
          %s282 = scalar_lea.sflag [#allocation3], %s281
          %s283 = sand.u32 %s94, 1
          %s284 = smul.addr %s283, 8
          %s285 = scalar_lea.vmem [#allocation2], %s284
          %286 = dma.done %s282, 128
        $region44: #{tpu_custom_call.1} parent=39 // pred_fallthru
          _
      $region40: #{tpu_custom_call.1} parent=5 // pred_fallthru
        _
    $region6: #{tpu_custom_call.1} parent=1 // loop_footer
      %s16 = sadd.s32 1, %s12
    $region7: #{tpu_custom_call.1} parent=1 // loop_footer_branch
      %11 = sbr.rel target = $region3
    $region8: #{tpu_custom_call.1} parent=1 // loop_exit
      _
    %287 = vsyncpa [#allocation3], 1
    %s288 = scalar_lea.sflag [#allocation3], 1
    %289 = vsyncpa %s288, 1

</llo_original>
